<compile_context>
chip_gen: v7x
topology: tpu7x:2x2x1
jax: 0.10.0
libtpu: 0.0.40
codegen_flags: <defaults>
</compile_context>

<pallas_src>
import functools

import jax
import jax.numpy as jnp
from jax import lax
from jax.experimental import pallas as pl
from jax.experimental.pallas import tpu as pltpu


def _double_conv_kernel(x_ref, g1_ref, b1_ref, g2_ref, b2_ref, o_ref, *, H):
    """One batch tile (batch_tile whole images) per grid step.

    x_ref  : (M, W*Cin)            M = batch_tile * H lane-flattened input rows
    g1_ref : (3*W*Cin,  W*Cmid)    stacked per-dy banded conv1 weights (BN1 folded)
    b1_ref : (1, W*Cmid)           BN1 bias, tiled per output lane
    g2_ref : (3*W*Cmid, W*Cout)    stacked per-dy banded conv2 weights (BN2 folded)
    b2_ref : (1, W*Cout)           BN2 bias, tiled per output lane
    o_ref  : (M, W*Cout)           lane-dense output rows
    """
    M = x_ref.shape[0]

    # Per-row image-boundary masks (height zero-padding + no bleeding across
    # the images stacked inside one batch tile).  O(M), VPU-only.
    row = lax.broadcasted_iota(jnp.int32, (M, 1), 0)
    top = (row % H) == 0          # first row of each image in the tile
    bot = (row % H) == (H - 1)    # last row of each image in the tile

    def conv_bn_relu(x, g_ref, b_ref):
        # x: (M, K)   g_ref: (3K, W*Co)   b_ref: (1, W*Co)
        K = x.shape[1]
        zero = jnp.zeros((1, K), x.dtype)
        # Static row shifts: x_dn[r] = x[r-1], x_up[r] = x[r+1]; boundary rows
        # are zeroed by the masks (implements the dy taps + height padding).
        x_dn = jnp.where(top, 0.0, jnp.concatenate([zero, x[:M - 1]], axis=0))
        x_up = jnp.where(bot, 0.0, jnp.concatenate([x[1:], zero], axis=0))
        # One wide-K MXU matmul per conv (K = 3 * W * Ci).
        xw = jnp.concatenate([x_dn, x, x_up], axis=1)          # (M, 3K)
        acc = jnp.dot(xw, g_ref[...], preferred_element_type=jnp.float32)
        return jnp.maximum(acc + b_ref[...], 0.0)

    y1 = conv_bn_relu(x_ref[...], g1_ref, b1_ref)              # (M, W*Cmid)
    o_ref[...] = conv_bn_relu(y1, g2_ref, b2_ref).astype(o_ref.dtype)


def _band_weight(w_hwio_scaled, W):
    """Build per-dy banded matrices (3, W*Ci, W*Co) from HWIO weights.

    G[dy, w'*Ci + ci, w*Co + o] = W[dy, w'-w+1, ci, o] if 0 <= w'-w+1 <= 2 else 0,
    i.e. the dx taps and the width zero-padding are baked into a dense matrix so
    a whole row of W output pixels comes out of one lane-dense MXU matmul.
    """
    _, _, Ci, Co = w_hwio_scaled.shape
    wp = jnp.arange(W)[:, None]          # input pixel  w'
    wo = jnp.arange(W)[None, :]          # output pixel w
    dx = wp - wo + 1                     # (W, W)
    valid = (dx >= 0) & (dx <= 2)
    dxc = jnp.clip(dx, 0, 2)

    def per_dy(w_dy):                    # w_dy: (3, Ci, Co)
        blocks = w_dy[dxc]               # (W, W, Ci, Co)
        blocks = jnp.where(valid[:, :, None, None], blocks, 0.0)
        return blocks.transpose(0, 2, 1, 3).reshape(W * Ci, W * Co)

    return jnp.stack([per_dy(w_hwio_scaled[dy]) for dy in range(3)], axis=0)


def _pick_batch_tile(N, H, W, Cmax):
    """Largest divisor of N that keeps the block modest, sublane-aligned and
    leaves >= 2 grid steps for v7x's two TensorCores."""
    budget_bytes = 2 << 20               # widest per-block activation budget
    max_bt = N if N < 2 else max(1, N // 2)
    best = None
    for bt in range(1, max_bt + 1):
        if N % bt:
            continue
        if (bt * H) % 8 != 0:            # (8,128) sublane alignment of the block
            continue
        if bt * H * W * Cmax * 4 > budget_bytes:
            break
        best = bt
    if best is None:
        best = N                         # full-array block (always legal)
    return best


@jax.jit
def double_conv(x_nchw, w1, g1, be1, rm1, rv1, w2, g2, be2, rm2, rv2, eps=1e-5):
    """x_nchw: (N, Cin, H, W) float32.  Conv weights w1/w2 in PyTorch OIHW."""
    N, Cin, H, W = x_nchw.shape
    Cmid = w1.shape[0]
    Cout = w2.shape[0]

    # NCHW -> NHWC -> lane-dense 2-D rows (free, contiguous reshape).
    x2 = jnp.transpose(x_nchw, (0, 2, 3, 1)).reshape(N * H, W * Cin)

    # Fold eval-mode BatchNorm: scale into the conv weights, bias kept separate.
    s1 = g1 / jnp.sqrt(rv1 + eps)
    b1 = be1 - rm1 * s1
    s2 = g2 / jnp.sqrt(rv2 + eps)
    b2 = be2 - rm2 * s2

    w1_hwio = jnp.transpose(w1, (2, 3, 1, 0)) * s1     # (3,3,Cin,Cmid), scaled
    w2_hwio = jnp.transpose(w2, (2, 3, 1, 0)) * s2     # (3,3,Cmid,Cout), scaled

    # Stacked wide-K banded weights: rows ordered [dy=0 | dy=1 | dy=2] to match
    # the in-kernel [x_dn | x | x_up] concatenation.
    G1 = _band_weight(w1_hwio, W).reshape(3 * W * Cin, W * Cmid)
    G2 = _band_weight(w2_hwio, W).reshape(3 * W * Cmid, W * Cout)
    b1_row = jnp.tile(b1, W).reshape(1, W * Cmid)
    b2_row = jnp.tile(b2, W).reshape(1, W * Cout)

    Bt = _pick_batch_tile(N, H, W, max(Cin, Cmid, Cout))
    M = Bt * H

    # Explicit VMEM budget (double-buffered I/O blocks + resident weights +
    # in-kernel temporaries), clamped well inside v7x's 64 MiB VMEM.
    needed = 4 * (
        2 * M * W * Cin                                   # input block (x2)
        + 2 * M * W * Cout                                # output block
        + 2 * (G1.size + G2.size + W * Cmid + W * Cout)   # weights + biases
        + M * (3 * W * Cin + 3 * W * Cmid + 2 * W * Cout) # xw / y1 / acc temps
    )
    vmem_limit = int(min(max(4 * needed, 16 << 20), 48 << 20))

    out2 = pl.pallas_call(
        functools.partial(_double_conv_kernel, H=H),
        out_shape=jax.ShapeDtypeStruct((N * H, W * Cout), jnp.float32),
        grid_spec=pltpu.PrefetchScalarGridSpec(
            num_scalar_prefetch=0,
            grid=(N // Bt,),
            in_specs=[
                pl.BlockSpec((M, W * Cin), lambda n: (n, 0)),
                pl.BlockSpec((3 * W * Cin, W * Cmid), lambda n: (0, 0)),
                pl.BlockSpec((1, W * Cmid), lambda n: (0, 0)),
                pl.BlockSpec((3 * W * Cmid, W * Cout), lambda n: (0, 0)),
                pl.BlockSpec((1, W * Cout), lambda n: (0, 0)),
            ],
            out_specs=pl.BlockSpec((M, W * Cout), lambda n: (n, 0)),
        ),
        compiler_params=pltpu.CompilerParams(
            dimension_semantics=("parallel",),
            vmem_limit_bytes=vmem_limit),
    )(x2, G1, b1_row, G2, b2_row)

    # Lane-dense rows -> NHWC -> NCHW (PyTorch output convention).
    return out2.reshape(N, H, W, Cout).transpose(0, 3, 1, 2)


def _reference(x_nchw, w1, g1, be1, rm1, rv1, w2, g2, be2, rm2, rv2, eps=1e-5):
    """Pure-JAX reference (NHWC lax conv) for correctness checking."""
    x = jnp.transpose(x_nchw, (0, 2, 3, 1))
    dn = lax.conv_dimension_numbers(x.shape, (3, 3, x.shape[-1], w1.shape[0]),
                                    ("NHWC", "HWIO", "NHWC"))

    def conv_bn_relu(y, w_oihw, g, be, rm, rv):
        w = jnp.transpose(w_oihw, (2, 3, 1, 0))
        y = lax.conv_general_dilated(y, w, (1, 1), ((1, 1), (1, 1)),
                                     dimension_numbers=dn)
        y = (y - rm) / jnp.sqrt(rv + eps) * g + be
        return jnp.maximum(y, 0.0)

    y = conv_bn_relu(x, w1, g1, be1, rm1, rv1)
    y = conv_bn_relu(y, w2, g2, be2, rm2, rv2)
    return jnp.transpose(y, (0, 3, 1, 2))


if __name__ == "__main__":
    N, Cin, Cout, H, W = 2, 4, 8, 16, 16
    key = jax.random.PRNGKey(0)
    ks = jax.random.split(key, 12)

    x = jax.random.normal(ks[0], (N, Cin, H, W), jnp.float32)

    # Conv weights in PyTorch OIHW layout (bias=False).
    w1 = jax.random.normal(ks[1], (Cout, Cin, 3, 3), jnp.float32) * 0.2
    w2 = jax.random.normal(ks[2], (Cout, Cout, 3, 3), jnp.float32) * 0.2

    # BatchNorm parameters / running stats (deterministic synthetic values).
    g1 = 1.0 + 0.1 * jax.random.normal(ks[3], (Cout,), jnp.float32)
    be1 = 0.1 * jax.random.normal(ks[4], (Cout,), jnp.float32)
    rm1 = 0.1 * jax.random.normal(ks[5], (Cout,), jnp.float32)
    rv1 = jnp.abs(jax.random.normal(ks[6], (Cout,), jnp.float32)) + 0.5
    g2 = 1.0 + 0.1 * jax.random.normal(ks[7], (Cout,), jnp.float32)
    be2 = 0.1 * jax.random.normal(ks[8], (Cout,), jnp.float32)
    rm2 = 0.1 * jax.random.normal(ks[9], (Cout,), jnp.float32)
    rv2 = jnp.abs(jax.random.normal(ks[10], (Cout,), jnp.float32)) + 0.5

    out = double_conv(x, w1, g1, be1, rm1, rv1, w2, g2, be2, rm2, rv2)
    out = jax.block_until_ready(out)

    ref = _reference(x, w1, g1, be1, rm1, rv1, w2, g2, be2, rm2, rv2)
    assert out.shape == (N, Cout, H, W), out.shape
    assert jnp.allclose(out, ref, rtol=1e-4, atol=1e-3), float(
        jnp.max(jnp.abs(out - ref)))

    print("KERNEL_OK")
</pallas_src>

<mosaic_0001>
module attributes {stable_mosaic.version = 11 : i64} {
  func.func @_double_conv_kernel(%arg0: i32, %arg1: memref<16x64xf32, #tpu.memory_space<vmem>>, %arg2: memref<192x128xf32, #tpu.memory_space<vmem>>, %arg3: memref<1x128xf32, #tpu.memory_space<vmem>>, %arg4: memref<384x128xf32, #tpu.memory_space<vmem>>, %arg5: memref<1x128xf32, #tpu.memory_space<vmem>>, %arg6: memref<16x128xf32, #tpu.memory_space<vmem>>) attributes {dimension_semantics = [#tpu.dimension_semantics<parallel>], iteration_bounds = array<i64: 2>, scalar_prefetch = 0 : i64, scratch_operands = 0 : i64, tpu.core_type = #tpu.core_type<tc>, window_params = [{transform_indices = @transform_0, window_bounds = array<i64: 16, 64>}, {pipeline_mode = #tpu.pipeline_mode<synchronous>, transform_indices = @transform_1, window_bounds = array<i64: 192, 128>}, {pipeline_mode = #tpu.pipeline_mode<synchronous>, transform_indices = @transform_2, window_bounds = array<i64: 1, 128>}, {pipeline_mode = #tpu.pipeline_mode<synchronous>, transform_indices = @transform_3, window_bounds = array<i64: 384, 128>}, {pipeline_mode = #tpu.pipeline_mode<synchronous>, transform_indices = @transform_4, window_bounds = array<i64: 1, 128>}, {transform_indices = @transform_5, window_bounds = array<i64: 16, 128>}]} {
    %0 = tpu.iota {dimensions = array<i32: 0>} : vector<16x1xi32>
    %c16_i32 = arith.constant 16 : i32
    %c0_i32 = arith.constant 0 : i32
    %1 = arith.cmpi eq, %c16_i32, %c0_i32 : i32
    %c1_i32 = arith.constant 1 : i32
    %2 = arith.select %1, %c1_i32, %c16_i32 : i32
    %3 = vector.broadcast %2 : i32 to vector<16x1xi32>
    %4 = arith.remsi %0, %3 : vector<16x1xi32>
    %c0_i32_0 = arith.constant 0 : i32
    %5 = vector.broadcast %c0_i32_0 : i32 to vector<16x1xi32>
    %6 = arith.cmpi ne, %4, %5 : vector<16x1xi32>
    %c0_i32_1 = arith.constant 0 : i32
    %7 = vector.broadcast %c0_i32_1 : i32 to vector<16x1xi32>
    %8 = arith.cmpi slt, %4, %7 : vector<16x1xi32>
    %c0_i32_2 = arith.constant 0 : i32
    %9 = arith.cmpi slt, %2, %c0_i32_2 : i32
    %10 = vector.broadcast %9 : i1 to vector<16x1xi1>
    %11 = vector.broadcast %10 : vector<16x1xi1> to vector<16x1xi1>
    %12 = arith.xori %8, %11 : vector<16x1xi1>
    %13 = arith.andi %12, %6 : vector<16x1xi1>
    %14 = vector.broadcast %2 : i32 to vector<16x1xi32>
    %15 = arith.addi %4, %14 : vector<16x1xi32>
    %16 = arith.select %13, %15, %4 : vector<16x1xi1>, vector<16x1xi32>
    %c0_i32_3 = arith.constant 0 : i32
    %17 = vector.broadcast %c0_i32_3 : i32 to vector<16x1xi32>
    %18 = arith.cmpi eq, %16, %17 : vector<16x1xi32>
    %c16_i32_4 = arith.constant 16 : i32
    %c0_i32_5 = arith.constant 0 : i32
    %19 = arith.cmpi eq, %c16_i32_4, %c0_i32_5 : i32
    %c1_i32_6 = arith.constant 1 : i32
    %20 = arith.select %19, %c1_i32_6, %c16_i32_4 : i32
    %21 = vector.broadcast %20 : i32 to vector<16x1xi32>
    %22 = arith.remsi %0, %21 : vector<16x1xi32>
    %c0_i32_7 = arith.constant 0 : i32
    %23 = vector.broadcast %c0_i32_7 : i32 to vector<16x1xi32>
    %24 = arith.cmpi ne, %22, %23 : vector<16x1xi32>
    %c0_i32_8 = arith.constant 0 : i32
    %25 = vector.broadcast %c0_i32_8 : i32 to vector<16x1xi32>
    %26 = arith.cmpi slt, %22, %25 : vector<16x1xi32>
    %c0_i32_9 = arith.constant 0 : i32
    %27 = arith.cmpi slt, %20, %c0_i32_9 : i32
    %28 = vector.broadcast %27 : i1 to vector<16x1xi1>
    %29 = vector.broadcast %28 : vector<16x1xi1> to vector<16x1xi1>
    %30 = arith.xori %26, %29 : vector<16x1xi1>
    %31 = arith.andi %30, %24 : vector<16x1xi1>
    %32 = vector.broadcast %20 : i32 to vector<16x1xi32>
    %33 = arith.addi %22, %32 : vector<16x1xi32>
    %34 = arith.select %31, %33, %22 : vector<16x1xi1>, vector<16x1xi32>
    %c15_i32 = arith.constant 15 : i32
    %35 = vector.broadcast %c15_i32 : i32 to vector<16x1xi32>
    %36 = arith.cmpi eq, %34, %35 : vector<16x1xi32>
    %c0 = arith.constant 0 : index
    %c0_10 = arith.constant 0 : index
    %37 = vector.load %arg1[%c0, %c0_10] : memref<16x64xf32, #tpu.memory_space<vmem>>, vector<16x64xf32>
    %cst = arith.constant 0.000000e+00 : f32
    %38 = vector.broadcast %cst : f32 to vector<1x64xf32>
    %39 = vector.extract_strided_slice %37 {offsets = [0, 0], sizes = [15, 64], strides = [1, 1]} : vector<16x64xf32> to vector<15x64xf32>
    %40 = tpu.concatenate %38, %39 in 0 : vector<1x64xf32>, vector<15x64xf32> -> vector<16x64xf32>
    %cst_11 = arith.constant 0.000000e+00 : f32
    %41 = vector.shape_cast %18 : vector<16x1xi1> to vector<16x1xi1>
    %42 = vector.broadcast %41 : vector<16x1xi1> to vector<16x64xi1>
    %43 = vector.broadcast %cst_11 : f32 to vector<16x64xf32>
    %44 = arith.select %42, %43, %40 : vector<16x64xi1>, vector<16x64xf32>
    %45 = vector.extract_strided_slice %37 {offsets = [1, 0], sizes = [15, 64], strides = [1, 1]} : vector<16x64xf32> to vector<15x64xf32>
    %46 = tpu.concatenate %45, %38 in 0 : vector<15x64xf32>, vector<1x64xf32> -> vector<16x64xf32>
    %cst_12 = arith.constant 0.000000e+00 : f32
    %47 = vector.shape_cast %36 : vector<16x1xi1> to vector<16x1xi1>
    %48 = vector.broadcast %47 : vector<16x1xi1> to vector<16x64xi1>
    %49 = vector.broadcast %cst_12 : f32 to vector<16x64xf32>
    %50 = arith.select %48, %49, %46 : vector<16x64xi1>, vector<16x64xf32>
    %51 = tpu.concatenate %44, %37, %50 in 1 : vector<16x64xf32>, vector<16x64xf32>, vector<16x64xf32> -> vector<16x192xf32>
    %c0_13 = arith.constant 0 : index
    %c0_14 = arith.constant 0 : index
    %52 = vector.load %arg2[%c0_13, %c0_14] : memref<192x128xf32, #tpu.memory_space<vmem>>, vector<192x128xf32>
    %cst_15 = arith.constant dense<0.000000e+00> : vector<16x128xf32>
    %53 = tpu.matmul %51, %52, %cst_15 {dimension_numbers = #tpu.dot_dimension_numbers<[1], [0], [0], [1], [0, 0, 1, 1], [], []>} : vector<16x192xf32>, vector<192x128xf32>, vector<16x128xf32> -> vector<16x128xf32>
    %c0_16 = arith.constant 0 : index
    %c0_17 = arith.constant 0 : index
    %54 = vector.load %arg3[%c0_16, %c0_17] : memref<1x128xf32, #tpu.memory_space<vmem>>, vector<1x128xf32>
    %55 = vector.broadcast %54 : vector<1x128xf32> to vector<16x128xf32>
    %56 = arith.addf %53, %55 : vector<16x128xf32>
    %cst_18 = arith.constant 0.000000e+00 : f32
    %57 = vector.broadcast %cst_18 : f32 to vector<16x128xf32>
    %58 = arith.maximumf %56, %57 : vector<16x128xf32>
    %cst_19 = arith.constant 0.000000e+00 : f32
    %59 = vector.broadcast %cst_19 : f32 to vector<1x128xf32>
    %60 = vector.extract_strided_slice %58 {offsets = [0, 0], sizes = [15, 128], strides = [1, 1]} : vector<16x128xf32> to vector<15x128xf32>
    %61 = tpu.concatenate %59, %60 in 0 : vector<1x128xf32>, vector<15x128xf32> -> vector<16x128xf32>
    %cst_20 = arith.constant 0.000000e+00 : f32
    %62 = vector.shape_cast %18 : vector<16x1xi1> to vector<16x1xi1>
    %63 = vector.broadcast %62 : vector<16x1xi1> to vector<16x128xi1>
    %64 = vector.broadcast %cst_20 : f32 to vector<16x128xf32>
    %65 = arith.select %63, %64, %61 : vector<16x128xi1>, vector<16x128xf32>
    %66 = vector.extract_strided_slice %58 {offsets = [1, 0], sizes = [15, 128], strides = [1, 1]} : vector<16x128xf32> to vector<15x128xf32>
    %67 = tpu.concatenate %66, %59 in 0 : vector<15x128xf32>, vector<1x128xf32> -> vector<16x128xf32>
    %cst_21 = arith.constant 0.000000e+00 : f32
    %68 = vector.shape_cast %36 : vector<16x1xi1> to vector<16x1xi1>
    %69 = vector.broadcast %68 : vector<16x1xi1> to vector<16x128xi1>
    %70 = vector.broadcast %cst_21 : f32 to vector<16x128xf32>
    %71 = arith.select %69, %70, %67 : vector<16x128xi1>, vector<16x128xf32>
    %72 = tpu.concatenate %65, %58, %71 in 1 : vector<16x128xf32>, vector<16x128xf32>, vector<16x128xf32> -> vector<16x384xf32>
    %c0_22 = arith.constant 0 : index
    %c0_23 = arith.constant 0 : index
    %73 = vector.load %arg4[%c0_22, %c0_23] : memref<384x128xf32, #tpu.memory_space<vmem>>, vector<384x128xf32>
    %cst_24 = arith.constant dense<0.000000e+00> : vector<16x128xf32>
    %74 = tpu.matmul %72, %73, %cst_24 {dimension_numbers = #tpu.dot_dimension_numbers<[1], [0], [0], [1], [0, 0, 1, 1], [], []>} : vector<16x384xf32>, vector<384x128xf32>, vector<16x128xf32> -> vector<16x128xf32>
    %c0_25 = arith.constant 0 : index
    %c0_26 = arith.constant 0 : index
    %75 = vector.load %arg5[%c0_25, %c0_26] : memref<1x128xf32, #tpu.memory_space<vmem>>, vector<1x128xf32>
    %76 = vector.broadcast %75 : vector<1x128xf32> to vector<16x128xf32>
    %77 = arith.addf %74, %76 : vector<16x128xf32>
    %cst_27 = arith.constant 0.000000e+00 : f32
    %78 = vector.broadcast %cst_27 : f32 to vector<16x128xf32>
    %79 = arith.maximumf %77, %78 : vector<16x128xf32>
    %c0_28 = arith.constant 0 : index
    %c0_29 = arith.constant 0 : index
    %80 = vector.load %arg6[%c0_28, %c0_29] : memref<16x128xf32, #tpu.memory_space<vmem>>, vector<16x128xf32>
    tpu.vector_store %arg6[%c0_28, %c0_29], %79 {strides = array<i32>} : memref<16x128xf32, #tpu.memory_space<vmem>>, vector<16x128xf32>,
    return
  }
  func.func @transform_0(%arg0: i32) -> (i32, i32) {
    %c0_i32 = arith.constant 0 : i32
    %c0_i32_0 = arith.constant 0 : i32
    return %arg0, %c0_i32 : i32, i32
  }
  func.func @transform_1(%arg0: i32) -> (i32, i32) {
    %c0_i32 = arith.constant 0 : i32
    %c0_i32_0 = arith.constant 0 : i32
    %c0_i32_1 = arith.constant 0 : i32
    return %c0_i32, %c0_i32_0 : i32, i32
  }
  func.func @transform_2(%arg0: i32) -> (i32, i32) {
    %c0_i32 = arith.constant 0 : i32
    %c0_i32_0 = arith.constant 0 : i32
    %c0_i32_1 = arith.constant 0 : i32
    return %c0_i32, %c0_i32_0 : i32, i32
  }
  func.func @transform_3(%arg0: i32) -> (i32, i32) {
    %c0_i32 = arith.constant 0 : i32
    %c0_i32_0 = arith.constant 0 : i32
    %c0_i32_1 = arith.constant 0 : i32
    return %c0_i32, %c0_i32_0 : i32, i32
  }
  func.func @transform_4(%arg0: i32) -> (i32, i32) {
    %c0_i32 = arith.constant 0 : i32
    %c0_i32_0 = arith.constant 0 : i32
    %c0_i32_1 = arith.constant 0 : i32
    return %c0_i32, %c0_i32_0 : i32, i32
  }
  func.func @transform_5(%arg0: i32) -> (i32, i32) {
    %c0_i32 = arith.constant 0 : i32
    %c0_i32_0 = arith.constant 0 : i32
    return %arg0, %c0_i32 : i32, i32
  }
}

</mosaic_0001>

<llo_original>
// kernel: tile.13
$region0: #{tile.13}
  #allocation0 [shape = 's32[1]{0}', space=sflag, size = 0x4, scoped, tag = 'scoped memory for tile.13']
  %s0 = inlined_call_operand.vmem [shape: f32[8], index: 0, kind: input, shape index: {}]
  %s1 = inlined_call_operand.vmem [shape: f32[16,8], index: 1, kind: output, shape index: {}]
  // Predicated region
  $region2: #{tile.13} parent=0 // pred_check
    _
  $region3: #{tile.13} parent=0 // pred_check_branch
    %3 = sbr.rel (0) target = $region5
  $region4: #{tile.13} parent=0 // pred_region
    _
  $region5: #{tile.13} parent=0 // pred_fallthru
    _
  %v4 = vld [vmem:[%s0] ss:$0 sm:$0xff]
  %5 = vst [vmem:[%s1] sm:$0xff] %v4
  %s6 = scalar_lea.vmem %s1, 8
  %7 = vst [vmem:[%s6] sm:$0xff] %v4

// kernel: tile.14
$region0: #{tile.14}
  %s0 = inlined_call_operand.vmem [shape: f32[16,8], index: 0, kind: input, shape index: {}]
  %s1 = inlined_call_operand.vmem [shape: f32[1,128], index: 1, kind: output, shape index: {}]
  $region1: #{tile.14} parent=0
    #allocation0 [shape = 'u8[4096]{0}', space=vmem, size = 0x1000, scoped, tag = 'scoped mem for output reshape']
    %v2 = vld [vmem:[%s0] sm:$0x1]
    %vm3 = vcmask 64512
    %4 = vst.msk [vmem:[#allocation0] sm:$0x1] %vm3, %v2
    %s5 = scalar_lea.vmem %s0, 15
    %v6 = vld [vmem:[%s5] sm:$0x1]
    %7 = vrot.lane.b32.xlu0 %v6, 120
    %v8 = vpop.permute.xlu0 %7
    %vm9 = vcmask 1048512
    %10 = vst.msk [vmem:[#allocation0] sm:$0x1] %vm9, %v8
    %s11 = scalar_lea.vmem %s0, 14
    %v12 = vld [vmem:[%s11] sm:$0x1]
    %13 = vrot.lane.b32.xlu0 %v12, 112
    %v14 = vpop.permute.xlu0 %13
    %vm15 = vcmask 982912
    %16 = vst.msk [vmem:[#allocation0] sm:$0x1] %vm15, %v14
    %s17 = scalar_lea.vmem %s0, 13
    %v18 = vld [vmem:[%s17] sm:$0x1]
    %19 = vrot.lane.b32.xlu0 %v18, 104
    %v20 = vpop.permute.xlu0 %19
    %vm21 = vcmask 917312
    %22 = vst.msk [vmem:[#allocation0] sm:$0x1] %vm21, %v20
    %s23 = scalar_lea.vmem %s0, 12
    %v24 = vld [vmem:[%s23] sm:$0x1]
    %25 = vrot.lane.b32.xlu0 %v24, 96
    %v26 = vpop.permute.xlu0 %25
    %vm27 = vcmask 851712
    %28 = vst.msk [vmem:[#allocation0] sm:$0x1] %vm27, %v26
    %s29 = scalar_lea.vmem %s0, 11
    %v30 = vld [vmem:[%s29] sm:$0x1]
    %31 = vrot.lane.b32.xlu0 %v30, 88
    %v32 = vpop.permute.xlu0 %31
    %vm33 = vcmask 786112
    %34 = vst.msk [vmem:[#allocation0] sm:$0x1] %vm33, %v32
    %s35 = scalar_lea.vmem %s0, 10
    %v36 = vld [vmem:[%s35] sm:$0x1]
    %37 = vrot.lane.b32.xlu0 %v36, 80
    %v38 = vpop.permute.xlu0 %37
    %vm39 = vcmask 720512
    %40 = vst.msk [vmem:[#allocation0] sm:$0x1] %vm39, %v38
    %s41 = scalar_lea.vmem %s0, 9
    %v42 = vld [vmem:[%s41] sm:$0x1]
    %43 = vrot.lane.b32.xlu0 %v42, 72
    %v44 = vpop.permute.xlu0 %43
    %vm45 = vcmask 654912
    %46 = vst.msk [vmem:[#allocation0] sm:$0x1] %vm45, %v44
    %s47 = scalar_lea.vmem %s0, 8
    %v48 = vld [vmem:[%s47] sm:$0x1]
    %49 = vrot.lane.b32.xlu0 %v48, 64
    %v50 = vpop.permute.xlu0 %49
    %vm51 = vcmask 589312
    %52 = vst.msk [vmem:[#allocation0] sm:$0x1] %vm51, %v50
    %s53 = scalar_lea.vmem %s0, 7
    %v54 = vld [vmem:[%s53] sm:$0x1]
    %55 = vrot.lane.b32.xlu0 %v54, 56
    %v56 = vpop.permute.xlu0 %55
    %vm57 = vcmask 523712
    %58 = vst.msk [vmem:[#allocation0] sm:$0x1] %vm57, %v56
    %s59 = scalar_lea.vmem %s0, 6
    %v60 = vld [vmem:[%s59] sm:$0x1]
    %61 = vrot.lane.b32.xlu0 %v60, 48
    %v62 = vpop.permute.xlu0 %61
    %vm63 = vcmask 458112
    %64 = vst.msk [vmem:[#allocation0] sm:$0x1] %vm63, %v62
    %s65 = scalar_lea.vmem %s0, 5
    %v66 = vld [vmem:[%s65] sm:$0x1]
    %67 = vrot.lane.b32.xlu0 %v66, 40
    %v68 = vpop.permute.xlu0 %67
    %vm69 = vcmask 392512
    %70 = vst.msk [vmem:[#allocation0] sm:$0x1] %vm69, %v68
    %s71 = scalar_lea.vmem %s0, 4
    %v72 = vld [vmem:[%s71] sm:$0x1]
    %73 = vrot.lane.b32.xlu0 %v72, 32
    %v74 = vpop.permute.xlu0 %73
    %vm75 = vcmask 326912
    %76 = vst.msk [vmem:[#allocation0] sm:$0x1] %vm75, %v74
    %s77 = scalar_lea.vmem %s0, 3
    %v78 = vld [vmem:[%s77] sm:$0x1]
    %79 = vrot.lane.b32.xlu0 %v78, 24
    %v80 = vpop.permute.xlu0 %79
    %vm81 = vcmask 261312
    %82 = vst.msk [vmem:[#allocation0] sm:$0x1] %vm81, %v80
    %s83 = scalar_lea.vmem %s0, 2
    %v84 = vld [vmem:[%s83] sm:$0x1]
    %85 = vrot.lane.b32.xlu0 %v84, 16
    %v86 = vpop.permute.xlu0 %85
    %vm87 = vcmask 195712
    %88 = vst.msk [vmem:[#allocation0] sm:$0x1] %vm87, %v86
    %s89 = scalar_lea.vmem %s0, 1
    %v90 = vld [vmem:[%s89] sm:$0x1]
    %91 = vrot.lane.b32.xlu0 %v90, 8
    %v92 = vpop.permute.xlu0 %91
    %vm93 = vcmask 130112
    %94 = vst.msk [vmem:[#allocation0] sm:$0x1] %vm93, %v92
    %s96 = sshllo.u32 0, 1
    %v98 = vld [vmem:[#allocation0] sm:%s96]
    %s99 = sshllo.u32 0, 1
    %100 = vst [vmem:[%s1] sm:%s99] %v98

// kernel: double_conv.1
$region0: #{double_conv.1}
  #allocation0 [shape = 'u32[]', space=smem, size = 0x4, offset = 0x4, fixed_abs, tag = 'smem constant byte address 0x4 - core index']
  #allocation1 [shape = 'u32[144,128]{1,0:T(1,128)}', space=vmem, size = 0x12000, scoped, tag = 'internal scratch']
  %s0 = inlined_call_operand.vmem [shape: f32[32,64], index: 0, kind: input, shape index: {}]
  %s1 = inlined_call_operand.vmem [shape: f32[192,128], index: 1, kind: input, shape index: {}]
  %s2 = inlined_call_operand.vmem [shape: f32[1,128], index: 2, kind: input, shape index: {}]
  %s3 = inlined_call_operand.vmem [shape: f32[384,128], index: 3, kind: input, shape index: {}]
  %s4 = inlined_call_operand.vmem [shape: f32[1,128], index: 4, kind: input, shape index: {}]
  %s5 = inlined_call_operand.vmem [shape: f32[32,128], index: 5, kind: output, shape index: {}]
  %s6 = sld [smem:[#allocation0]]
  $region53: #{double_conv.1} parent=0
    _
  %s8 = ssub.s32 1, %s6
  %s9 = scalar_select 0, %s8, %s6
  loop: start=0, step=1, limit=4
  $region2: #{double_conv.1} parent=0 // loop_pre_header
    _
  $region3: #{double_conv.1} parent=0 // loop_header
    %s11 = sphi 0, %s15
    %p12 = scmp.ge.s32.totalorder %s11, 4
    %s21 = sphi 0, %s23
    %s24 = sphi 0, %s21
    %s25 = sphi 0, %s24
    %s41 = sphi 0, %s25
    %s45 = sphi 0, %s45
    %s47 = sphi 0, %s45
    %s48 = sphi 0, %s47
    %s62 = sphi 0, %s48
    %s66 = sphi 0, %s66
    %s68 = sphi 0, %s66
    %s69 = sphi 0, %s68
    %s83 = sphi 0, %s69
    %s87 = sphi 0, %s87
    %s89 = sphi 0, %s87
    %s90 = sphi 0, %s89
    %s104 = sphi 0, %s90
    %s108 = sphi 0, %s108
    %s110 = sphi 0, %s108
    %s111 = sphi 0, %s110
    %s125 = sphi 0, %s111
    %s131 = sphi 0, %s133
    %s134 = sphi 0, %s131
    %s135 = sphi 0, %s134
    %s151 = sphi 0, %s135
  $region4: #{double_conv.1} parent=0 // loop_header_branch
    %14 = sbr.rel (%p12) target = $region8
  $region5: #{double_conv.1} parent=0 // loop_body
    %s16 = ssub.s32 %s11, 1
    %s17 = ssub.s32 %s11, 2
    %s18 = sadd.s32 %s11, 1
    %s19 = ssub.s32 %s11, %s18
    %p20 = scmp.eq.s32.totalorder %s19, 0
    %s22 = sadd.s32 %s21, 1
    %s23 = scalar_select %p20, %s21, %s22
    %p26 = pneg %p20
    %p27 = scmp.eq.s32.totalorder %s11, 1
    %p28 = por %p26, %p27
    %p29 = scmp.ne.s32.totalorder %s21, %s24
    %p30 = scmp.eq.s32.totalorder %s11, 0
    %p31 = por %p29, %p30
    %p32 = scmp.ne.s32.totalorder %s21, %s24
    %p33 = scmp.eq.s32.totalorder %s16, 1
    %p34 = por %p32, %p33
    %p35 = scmp.ne.s32.totalorder %s24, %s25
    %p36 = scmp.eq.s32.totalorder %s16, 0
    %p37 = por %p35, %p36
    %p38 = scmp.ne.s32.totalorder %s24, %s25
    %p39 = scmp.eq.s32.totalorder %s17, 1
    %p40 = por %p38, %p39
    %p42 = scmp.ne.s32.totalorder %s25, %s41
    %p43 = scmp.eq.s32.totalorder %s17, 0
    %p44 = por %p42, %p43
    %s46 = sadd.s32 %s45, 1
    %p49 = scmp.eq.s32.totalorder %s11, 1
    %p50 = scmp.ne.s32.totalorder %s45, %s47
    %p51 = scmp.eq.s32.totalorder %s11, 0
    %p52 = por %p50, %p51
    %p53 = scmp.ne.s32.totalorder %s45, %s47
    %p54 = scmp.eq.s32.totalorder %s16, 1
    %p55 = por %p53, %p54
    %p56 = scmp.ne.s32.totalorder %s47, %s48
    %p57 = scmp.eq.s32.totalorder %s16, 0
    %p58 = por %p56, %p57
    %p59 = scmp.ne.s32.totalorder %s47, %s48
    %p60 = scmp.eq.s32.totalorder %s17, 1
    %p61 = por %p59, %p60
    %p63 = scmp.ne.s32.totalorder %s48, %s62
    %p64 = scmp.eq.s32.totalorder %s17, 0
    %p65 = por %p63, %p64
    %s67 = sadd.s32 %s66, 1
    %p70 = scmp.eq.s32.totalorder %s11, 1
    %p71 = scmp.ne.s32.totalorder %s66, %s68
    %p72 = scmp.eq.s32.totalorder %s11, 0
    %p73 = por %p71, %p72
    %p74 = scmp.ne.s32.totalorder %s66, %s68
    %p75 = scmp.eq.s32.totalorder %s16, 1
    %p76 = por %p74, %p75
    %p77 = scmp.ne.s32.totalorder %s68, %s69
    %p78 = scmp.eq.s32.totalorder %s16, 0
    %p79 = por %p77, %p78
    %p80 = scmp.ne.s32.totalorder %s68, %s69
    %p81 = scmp.eq.s32.totalorder %s17, 1
    %p82 = por %p80, %p81
    %p84 = scmp.ne.s32.totalorder %s69, %s83
    %p85 = scmp.eq.s32.totalorder %s17, 0
    %p86 = por %p84, %p85
    %s88 = sadd.s32 %s87, 1
    %p91 = scmp.eq.s32.totalorder %s11, 1
    %p92 = scmp.ne.s32.totalorder %s87, %s89
    %p93 = scmp.eq.s32.totalorder %s11, 0
    %p94 = por %p92, %p93
    %p95 = scmp.ne.s32.totalorder %s87, %s89
    %p96 = scmp.eq.s32.totalorder %s16, 1
    %p97 = por %p95, %p96
    %p98 = scmp.ne.s32.totalorder %s89, %s90
    %p99 = scmp.eq.s32.totalorder %s16, 0
    %p100 = por %p98, %p99
    %p101 = scmp.ne.s32.totalorder %s89, %s90
    %p102 = scmp.eq.s32.totalorder %s17, 1
    %p103 = por %p101, %p102
    %p105 = scmp.ne.s32.totalorder %s90, %s104
    %p106 = scmp.eq.s32.totalorder %s17, 0
    %p107 = por %p105, %p106
    %s109 = sadd.s32 %s108, 1
    %p112 = scmp.eq.s32.totalorder %s11, 1
    %p113 = scmp.ne.s32.totalorder %s108, %s110
    %p114 = scmp.eq.s32.totalorder %s11, 0
    %p115 = por %p113, %p114
    %p116 = scmp.ne.s32.totalorder %s108, %s110
    %p117 = scmp.eq.s32.totalorder %s16, 1
    %p118 = por %p116, %p117
    %p119 = scmp.ne.s32.totalorder %s110, %s111
    %p120 = scmp.eq.s32.totalorder %s16, 0
    %p121 = por %p119, %p120
    %p122 = scmp.ne.s32.totalorder %s110, %s111
    %p123 = scmp.eq.s32.totalorder %s17, 1
    %p124 = por %p122, %p123
    %p126 = scmp.ne.s32.totalorder %s111, %s125
    %p127 = scmp.eq.s32.totalorder %s17, 0
    %p128 = por %p126, %p127
    %s129 = ssub.s32 %s11, %s18
    %p130 = scmp.eq.s32.totalorder %s129, 0
    %s132 = sadd.s32 %s131, 1
    %s133 = scalar_select %p130, %s131, %s132
    %p136 = pneg %p130
    %p137 = scmp.eq.s32.totalorder %s11, 1
    %p138 = por %p136, %p137
    %p139 = scmp.ne.s32.totalorder %s131, %s134
    %p140 = scmp.eq.s32.totalorder %s11, 0
    %p141 = por %p139, %p140
    %p142 = scmp.ne.s32.totalorder %s131, %s134
    %p143 = scmp.eq.s32.totalorder %s16, 1
    %p144 = por %p142, %p143
    %p145 = scmp.ne.s32.totalorder %s134, %s135
    %p146 = scmp.eq.s32.totalorder %s16, 0
    %p147 = por %p145, %p146
    %p148 = scmp.ne.s32.totalorder %s134, %s135
    %p149 = scmp.eq.s32.totalorder %s17, 1
    %p150 = por %p148, %p149
    %p152 = scmp.ne.s32.totalorder %s135, %s151
    %p153 = scmp.eq.s32.totalorder %s17, 0
    %p154 = por %p152, %p153
    %p155 = scmp.le.s32.totalorder 1, %s11
    %p156 = scmp.lt.s32.totalorder %s11, 3
    %p157 = pnand %p155, %p156
    %p158 = pneg %p157
    // Predicated region
    $region9: #{double_conv.1} parent=5 // pred_check
      _
    $region10: #{double_conv.1} parent=5 // pred_check_branch
      %160 = sbr.rel (%p157) target = $region12
    $region11: #{double_conv.1} parent=5 // pred_region
      %s161 = ssub.s32 %s11, 1
      // Predicated region
      $region13: #{double_conv.1} parent=11 // pred_check
        %p162 = pneg %p58
      $region14: #{double_conv.1} parent=11 // pred_check_branch
        %164 = sbr.rel (%p162) target = $region16
      $region15: #{double_conv.1} parent=11 // pred_region
        _
      $region16: #{double_conv.1} parent=11 // pred_fallthru
        _
      // Predicated region
      $region17: #{double_conv.1} parent=11 // pred_check
        %p165 = pneg %p79
      $region18: #{double_conv.1} parent=11 // pred_check_branch
        %167 = sbr.rel (%p165) target = $region20
      $region19: #{double_conv.1} parent=11 // pred_region
        _
      $region20: #{double_conv.1} parent=11 // pred_fallthru
        _
      // Predicated region
      $region21: #{double_conv.1} parent=11 // pred_check
        %p168 = pneg %p100
      $region22: #{double_conv.1} parent=11 // pred_check_branch
        %170 = sbr.rel (%p168) target = $region24
      $region23: #{double_conv.1} parent=11 // pred_region
        _
      $region24: #{double_conv.1} parent=11 // pred_fallthru
        _
      // Predicated region
      $region25: #{double_conv.1} parent=11 // pred_check
        %p171 = pneg %p121
      $region26: #{double_conv.1} parent=11 // pred_check_branch
        %173 = sbr.rel (%p171) target = $region28
      $region27: #{double_conv.1} parent=11 // pred_region
        _
      $region28: #{double_conv.1} parent=11 // pred_fallthru
        _
    $region12: #{double_conv.1} parent=5 // pred_fallthru
      _
    %p174 = scmp.lt.s32.totalorder %s11, 2
    // Predicated region
    $region29: #{double_conv.1} parent=5 // pred_check
      %p175 = pneg %p174
    $region30: #{double_conv.1} parent=5 // pred_check_branch
      %177 = sbr.rel (%p175) target = $region32
    $region31: #{double_conv.1} parent=5 // pred_region
      // Predicated region
      $region33: #{double_conv.1} parent=31 // pred_check
        %p178 = pneg %p31
      $region34: #{double_conv.1} parent=31 // pred_check_branch
        %180 = sbr.rel (%p178) target = $region36
      $region35: #{double_conv.1} parent=31 // pred_region
        %s181 = smul.u32 2, %s11
        %p182 = scmp.lt.s32.totalorder %s181, 3
        %s183 = scalar_select %p182, %s181, 3
        %s184 = smul.addr %s183, 8
        %s185 = scalar_lea.vmem %s0, %s184
        %s186 = smul.u32 2, %s11
      $region36: #{double_conv.1} parent=31 // pred_fallthru
        _
    $region32: #{double_conv.1} parent=5 // pred_fallthru
      _
    %p187 = scmp.le.s32.totalorder 1, %s11
    %p188 = scmp.lt.s32.totalorder %s11, 3
    %p189 = pnand %p187, %p188
    %p190 = pneg %p189
    // Predicated region
    $region37: #{double_conv.1} parent=5 // pred_check
      _
    $region38: #{double_conv.1} parent=5 // pred_check_branch
      %192 = sbr.rel (%p189) target = $region40
    $region39: #{double_conv.1} parent=5 // pred_region
      %s193 = ssub.s32 %s11, 1
      %s194 = smul.u32 2, %s16
      %p195 = scmp.lt.s32.totalorder %s194, 3
      %s196 = scalar_select %p195, %s194, 3
      %s197 = smul.addr %s196, 8
      %s198 = scalar_lea.vmem %s0, %s197
      %p199 = pneg %p37
      %p200 = pneg %p34
      %p201 = pneg %p58
      %p202 = pneg %p55
      %p203 = pneg %p79
      %p204 = pneg %p76
      %p205 = pneg %p100
      %p206 = pneg %p97
      %p207 = pneg %p121
      %p208 = pneg %p118
      %p209 = pneg %p147
      %p210 = pneg %p144
      %s211 = smul.u32 2, %s16
      %p212 = scmp.lt.s32.totalorder %s211, 3
      %s213 = scalar_select %p212, %s211, 3
      %s214 = smul.addr %s213, 8
      %s215 = scalar_lea.vmem %s5, %s214
      %s216 = smul.u32 2, %s16
      %p217 = scmp.lt.s32.totalorder %s216, 3
      %s218 = scalar_select %p217, %s216, 3
      %s219 = smul.addr %s218, 8
      %s220 = scalar_lea.vmem %s0, %s219
      %s221 = smul.u32 2, %s16
      %s222 = smul.u32 2, %s16
      %p223 = scmp.lt.s32.totalorder %s222, 3
      %s224 = scalar_select %p223, %s222, 3
      %s225 = smul.addr %s224, 8
      %s226 = scalar_lea.vmem %s5, %s225
      %s227 = smul.u32 2, %s16
      %v228 = vlaneseq
      %v229 = vshrl.u32 %v228, 7
      %v230 = vadd.s32 %v229, 8
      %vm231 = vcmp.lt.s32.totalorder %v229, 0
      %v232 = vsub.s32 0, %v229
      %v233 = vsel %vm231, %v232, %v229
      %v234 = vshrl.u32 %v233, 4
      %v235 = vand.u32 %v233, 15
      %v236 = vsub.s32 0, %v235
      %v237 = vsel %vm231, %v236, %v235
      %vm238 = vcmp.lt.s32.totalorder %v230, 0
      %v239 = vsub.s32 0, %v230
      %v240 = vsel %vm238, %v239, %v230
      %v241 = vshrl.u32 %v240, 4
      %v242 = vand.u32 %v240, 15
      %v243 = vsub.s32 0, %v242
      %v244 = vsel %vm238, %v243, %v242
      %vm245 = vcmp.ne.s32.totalorder %v237, 0
      %vm246 = vcmp.ne.s32.totalorder %v244, 0
      %vm247 = vcmp.lt.s32.totalorder %v237, 0
      %vm248 = vcmp.lt.s32.totalorder %v244, 0
      %vm249 = vmand %vm247, %vm245
      %vm250 = vmand %vm248, %vm246
      %v251 = vadd.s32 %v237, 16
      %v252 = vadd.s32 %v244, 16
      %v253 = vsel %vm249, %v251, %v237
      %v254 = vsel %vm250, %v252, %v244
      %vm255 = vcmp.eq.s32.totalorder %v253, 0
      %vm256 = vcmp.eq.s32.totalorder %v254, 0
      %vm257 = vcmp.eq.s32.totalorder %v253, 15
      %vm258 = vcmp.eq.s32.totalorder %v254, 15
      %v259 = vld [vmem:[%s220] sm:$0xff]
      %v260 = vld [vmem:[%s220 + $0x8] sm:$0xff]
      %vm263 = vcmask 1040384
      %v264 = vrot.slane %v259, 7
      %v265 = vrot.slane %v260, 7
      %v266 = vsel %vm263, %v264, %v265
      %v269 = vsel %vm263, 0.0, %v264
      %v270 = vsel %vm255, 1, 0
      %v271 = vsel %vm256, 1, 0
      %vm272 = vcmp.eq.s32.totalorder %v270, 1
      %vm273 = vcmp.eq.s32.totalorder %v271, 1
      %v274 = vsel %vm272, 0.0, %v269
      %v275 = vsel %vm273, 0.0, %v266
      %vm276 = vcmask 1046528
      %v277 = vrot.slane %v259, 1
      %v278 = vrot.slane %v260, 1
      %v279 = vsel %vm276, %v277, %v278
      %v282 = vsel %vm276, %v278, 0.0
      %v283 = vsel %vm257, 1, 0
      %v284 = vsel %vm258, 1, 0
      %vm285 = vcmp.eq.s32.totalorder %v283, 1
      %vm286 = vcmp.eq.s32.totalorder %v284, 1
      %v287 = vsel %vm285, 0.0, %v279
      %v288 = vsel %vm286, 0.0, %v282
      %289 = vrot.lane.b32.xlu0 %v259, 64
      %v290 = vpop.permute.xlu0 %289
      %291 = vrot.lane.b32.xlu0 %v260, 64
      %v292 = vpop.permute.xlu0 %291
      %vm295 = vcmask 523264
      %v296 = vsel %vm295, %v274, %v290
      %v297 = vsel %vm295, %v275, %v292
      %v298 = vld [vmem:[%s1] sm:$0xff]
      %v299 = vld [vmem:[%s1 + $0x8] sm:$0xff]
      %v300 = vld [vmem:[%s1 + $0x10] sm:$0xff]
      %v301 = vld [vmem:[%s1 + $0x18] sm:$0xff]
      %v302 = vld [vmem:[%s1 + $0x20] sm:$0xff]
      %v303 = vld [vmem:[%s1 + $0x28] sm:$0xff]
      %v304 = vld [vmem:[%s1 + $0x30] sm:$0xff]
      %v305 = vld [vmem:[%s1 + $0x38] sm:$0xff]
      %v306 = vld [vmem:[%s1 + $0x40] sm:$0xff]
      %v307 = vld [vmem:[%s1 + $0x48] sm:$0xff]
      %v308 = vld [vmem:[%s1 + $0x50] sm:$0xff]
      %v309 = vld [vmem:[%s1 + $0x58] sm:$0xff]
      %v310 = vld [vmem:[%s1 + $0x60] sm:$0xff]
      %v311 = vld [vmem:[%s1 + $0x68] sm:$0xff]
      %v312 = vld [vmem:[%s1 + $0x70] sm:$0xff]
      %v313 = vld [vmem:[%s1 + $0x78] sm:$0xff]
      %v314 = vld [vmem:[%s1 + $0x80] sm:$0xff]
      %v315 = vld [vmem:[%s1 + $0x88] sm:$0xff]
      %v316 = vld [vmem:[%s1 + $0x90] sm:$0xff]
      %v317 = vld [vmem:[%s1 + $0x98] sm:$0xff]
      %v318 = vld [vmem:[%s1 + $0xa0] sm:$0xff]
      %v319 = vld [vmem:[%s1 + $0xa8] sm:$0xff]
      %v320 = vld [vmem:[%s1 + $0xb0] sm:$0xff]
      %v321 = vld [vmem:[%s1 + $0xb8] sm:$0xff]
      %v322 = vld [vmem:[%s2] sm:$0x1]
      %v324 = vlaneseq
      %v325 = vshrl.u32 %v324, 7
      %v326 = vsub.s32 0, %v325
      %v327 = vrot.slane %v322, %v326
      %v330 = vsel %vm295, %v287, 0
      %v333 = vsel %vm295, %v288, 0
      %335 = vmatprep.subr.mxu0 0.0
      %336 = vmatpush1.msra.mxu0 %v298
      %337 = vmatprep.subr.mxu0 0.0
      %338 = vmatpush1.msra.mxu0 %v299
      %339 = vmatprep.subr.mxu0 0.0
      %340 = vmatpush1.msra.mxu0 %v300
      %341 = vmatprep.subr.mxu0 0.0
      %342 = vmatpush1.msra.mxu0 %v301
      %343 = vmatprep.subr.mxu0 0.0
      %344 = vmatpush1.msra.mxu0 %v302
      %345 = vmatprep.subr.mxu0 0.0
      %346 = vmatpush1.msra.mxu0 %v303
      %347 = vmatprep.subr.mxu0 0.0
      %348 = vmatpush1.msra.mxu0 %v304
      %349 = vmatprep.subr.mxu0 0.0
      %350 = vmatpush1.msra.mxu0 %v305
      %351 = vmatprep.subr.mxu0 0.0
      %352 = vmatpush1.msra.mxu0 %v306
      %353 = vmatprep.subr.mxu0 0.0
      %354 = vmatpush1.msra.mxu0 %v307
      %355 = vmatprep.subr.mxu0 0.0
      %356 = vmatpush1.msra.mxu0 %v308
      %357 = vmatprep.subr.mxu0 0.0
      %358 = vmatpush1.msra.mxu0 %v309
      %359 = vmatprep.subr.mxu0 0.0
      %360 = vmatpush1.msra.mxu0 %v310
      %361 = vmatprep.subr.mxu0 0.0
      %362 = vmatpush1.msra.mxu0 %v311
      %363 = vmatprep.subr.mxu0 0.0
      %364 = vmatpush1.msra.mxu0 %v312
      %365 = vmatprep.subr.mxu0 0.0
      %366 = vmatpush1.msra.mxu0 %v313
      %367 = vmatprep.subr.mxu0 0.0
      %368 = vmatpush1.msra.mxu0 %v314
      %369 = vmatprep.subr.mxu0 0.0
      %370 = vmatpush1.msra.mxu0 %v315
      %371 = vmatprep.subr.mxu0 0.0
      %372 = vmatpush1.msra.mxu0 %v316
      %373 = vmatprep.subr.mxu0 0.0
      %374 = vmatpush1.msra.mxu0 %v317
      %375 = vmatprep.subr.mxu0 0.0
      %376 = vmatpush1.msra.mxu0 %v318
      %377 = vmatprep.subr.mxu0 0.0
      %378 = vmatpush1.msra.mxu0 %v319
      %379 = vmatprep.subr.mxu0 0.0
      %380 = vmatpush1.msra.mxu0 %v320
      %381 = vmatprep.subr.mxu0 0.0
      %382 = vmatpush1.msra.mxu0 %v321
      %383 = vmatprep.subr.mxu0 0.0
      %384 = vmatpush1.msra.mxu0 0.0
      %385 = vmatprep.subr.mxu0 0.0
      %386 = vmatpush1.msra.mxu0 0.0
      %387 = vmatprep.subr.mxu0 0.0
      %388 = vmatpush1.msra.mxu0 0.0
      %389 = vmatprep.subr.mxu0 0.0
      %390 = vmatpush1.msra.mxu0 0.0
      %391 = vmatprep.subr.mxu0 0.0
      %392 = vmatpush1.msra.mxu0 0.0
      %393 = vmatprep.subr.mxu0 0.0
      %394 = vmatpush1.msra.mxu0 0.0
      %395 = vmatprep.subr.mxu0 0.0
      %396 = vmatpush1.msra.mxu0 0.0
      %397 = vmatprep.subr.mxu0 0.0
      %398 = vmatpush1.msra.mxu0 0.0
      %399 = vmatprep.mubr.f32.mxu0 %v330
      %400 = vmatmul.mubr.f32.gmra.mrb[0].mxu0 %v296
      %v401 = vpop.f32.mrb[0].mxu0
      %v402 = vadd.f32 %v327, %v401
      %v403 = vpop.f32.mrb[0].mxu0
      %404 = vmatprep.mubr.f32.mxu0 %v333
      %405 = vmatmul.mubr.f32.gmra.mrb[0].mxu0 %v297
      %v406 = vpop.f32.mrb[0].mxu0
      %v407 = vadd.f32 %v327, %v406
      %v408 = vpop.f32.mrb[0].mxu0
      %409 = vdwg.mxu0
      %v410 = vmax.f32 %v402, 0.0
      %v411 = vmax.f32 %v407, 0.0
      %v414 = vrot.slane %v410, 7
      %v415 = vrot.slane %v411, 7
      %v416 = vsel %vm263, %v414, %v415
      %v419 = vsel %vm263, 0.0, %v414
      %v420 = vsel %vm272, 0.0, %v419
      %v421 = vsel %vm273, 0.0, %v416
      %v422 = vrot.slane %v410, 1
      %v423 = vrot.slane %v411, 1
      %v424 = vsel %vm276, %v422, %v423
      %v427 = vsel %vm276, %v423, 0.0
      %v428 = vsel %vm285, 0.0, %v424
      %v429 = vsel %vm286, 0.0, %v427
      %v430 = vld [vmem:[%s3] sm:$0xff]
      %v431 = vld [vmem:[%s3 + $0x8] sm:$0xff]
      %v432 = vld [vmem:[%s3 + $0x10] sm:$0xff]
      %v433 = vld [vmem:[%s3 + $0x18] sm:$0xff]
      %v434 = vld [vmem:[%s3 + $0x20] sm:$0xff]
      %v435 = vld [vmem:[%s3 + $0x28] sm:$0xff]
      %v436 = vld [vmem:[%s3 + $0x30] sm:$0xff]
      %v437 = vld [vmem:[%s3 + $0x38] sm:$0xff]
      %v438 = vld [vmem:[%s3 + $0x40] sm:$0xff]
      %v439 = vld [vmem:[%s3 + $0x48] sm:$0xff]
      %v440 = vld [vmem:[%s3 + $0x50] sm:$0xff]
      %v441 = vld [vmem:[%s3 + $0x58] sm:$0xff]
      %v442 = vld [vmem:[%s3 + $0x60] sm:$0xff]
      %v443 = vld [vmem:[%s3 + $0x68] sm:$0xff]
      %v444 = vld [vmem:[%s3 + $0x70] sm:$0xff]
      %v445 = vld [vmem:[%s3 + $0x78] sm:$0xff]
      %v446 = vld [vmem:[%s3 + $0x80] sm:$0xff]
      %v447 = vld [vmem:[%s3 + $0x88] sm:$0xff]
      %v448 = vld [vmem:[%s3 + $0x90] sm:$0xff]
      %v449 = vld [vmem:[%s3 + $0x98] sm:$0xff]
      %v450 = vld [vmem:[%s3 + $0xa0] sm:$0xff]
      %v451 = vld [vmem:[%s3 + $0xa8] sm:$0xff]
      %v452 = vld [vmem:[%s3 + $0xb0] sm:$0xff]
      %v453 = vld [vmem:[%s3 + $0xb8] sm:$0xff]
      %v454 = vld [vmem:[%s3 + $0xc0] sm:$0xff]
      %v455 = vld [vmem:[%s3 + $0xc8] sm:$0xff]
      %v456 = vld [vmem:[%s3 + $0xd0] sm:$0xff]
      %v457 = vld [vmem:[%s3 + $0xd8] sm:$0xff]
      %v458 = vld [vmem:[%s3 + $0xe0] sm:$0xff]
      %v459 = vld [vmem:[%s3 + $0xe8] sm:$0xff]
      %v460 = vld [vmem:[%s3 + $0xf0] sm:$0xff]
      %v461 = vld [vmem:[%s3 + $0xf8] sm:$0xff]
      %v462 = vld [vmem:[%s3 + $0x100] sm:$0xff]
      %v463 = vld [vmem:[%s3 + $0x108] sm:$0xff]
      %v464 = vld [vmem:[%s3 + $0x110] sm:$0xff]
      %v465 = vld [vmem:[%s3 + $0x118] sm:$0xff]
      %v466 = vld [vmem:[%s3 + $0x120] sm:$0xff]
      %v467 = vld [vmem:[%s3 + $0x128] sm:$0xff]
      %v468 = vld [vmem:[%s3 + $0x130] sm:$0xff]
      %v469 = vld [vmem:[%s3 + $0x138] sm:$0xff]
      %v470 = vld [vmem:[%s3 + $0x140] sm:$0xff]
      %v471 = vld [vmem:[%s3 + $0x148] sm:$0xff]
      %v472 = vld [vmem:[%s3 + $0x150] sm:$0xff]
      %v473 = vld [vmem:[%s3 + $0x158] sm:$0xff]
      %v474 = vld [vmem:[%s3 + $0x160] sm:$0xff]
      %v475 = vld [vmem:[%s3 + $0x168] sm:$0xff]
      %v476 = vld [vmem:[%s3 + $0x170] sm:$0xff]
      %v477 = vld [vmem:[%s3 + $0x178] sm:$0xff]
      %v478 = vld [vmem:[%s4] sm:$0x1]
      %v480 = vlaneseq
      %v481 = vshrl.u32 %v480, 7
      %v482 = vsub.s32 0, %v481
      %v483 = vrot.slane %v478, %v482
      %485 = vmatprep.subr.mxu0 0.0
      %486 = vmatpush1.msra.mxu0 %v430
      %487 = vmatprep.subr.mxu0 0.0
      %488 = vmatpush1.msra.mxu0 %v431
      %489 = vmatprep.subr.mxu0 0.0
      %490 = vmatpush1.msra.mxu0 %v432
      %491 = vmatprep.subr.mxu0 0.0
      %492 = vmatpush1.msra.mxu0 %v433
      %493 = vmatprep.subr.mxu0 0.0
      %494 = vmatpush1.msra.mxu0 %v434
      %495 = vmatprep.subr.mxu0 0.0
      %496 = vmatpush1.msra.mxu0 %v435
      %497 = vmatprep.subr.mxu0 0.0
      %498 = vmatpush1.msra.mxu0 %v436
      %499 = vmatprep.subr.mxu0 0.0
      %500 = vmatpush1.msra.mxu0 %v437
      %501 = vmatprep.subr.mxu0 0.0
      %502 = vmatpush1.msra.mxu0 %v438
      %503 = vmatprep.subr.mxu0 0.0
      %504 = vmatpush1.msra.mxu0 %v439
      %505 = vmatprep.subr.mxu0 0.0
      %506 = vmatpush1.msra.mxu0 %v440
      %507 = vmatprep.subr.mxu0 0.0
      %508 = vmatpush1.msra.mxu0 %v441
      %509 = vmatprep.subr.mxu0 0.0
      %510 = vmatpush1.msra.mxu0 %v442
      %511 = vmatprep.subr.mxu0 0.0
      %512 = vmatpush1.msra.mxu0 %v443
      %513 = vmatprep.subr.mxu0 0.0
      %514 = vmatpush1.msra.mxu0 %v444
      %515 = vmatprep.subr.mxu0 0.0
      %516 = vmatpush1.msra.mxu0 %v445
      %517 = vmatprep.subr.mxu0 0.0
      %518 = vmatpush1.msra.mxu0 %v446
      %519 = vmatprep.subr.mxu0 0.0
      %520 = vmatpush1.msra.mxu0 %v447
      %521 = vmatprep.subr.mxu0 0.0
      %522 = vmatpush1.msra.mxu0 %v448
      %523 = vmatprep.subr.mxu0 0.0
      %524 = vmatpush1.msra.mxu0 %v449
      %525 = vmatprep.subr.mxu0 0.0
      %526 = vmatpush1.msra.mxu0 %v450
      %527 = vmatprep.subr.mxu0 0.0
      %528 = vmatpush1.msra.mxu0 %v451
      %529 = vmatprep.subr.mxu0 0.0
      %530 = vmatpush1.msra.mxu0 %v452
      %531 = vmatprep.subr.mxu0 0.0
      %532 = vmatpush1.msra.mxu0 %v453
      %533 = vmatprep.subr.mxu0 0.0
      %534 = vmatpush1.msra.mxu0 %v454
      %535 = vmatprep.subr.mxu0 0.0
      %536 = vmatpush1.msra.mxu0 %v455
      %537 = vmatprep.subr.mxu0 0.0
      %538 = vmatpush1.msra.mxu0 %v456
      %539 = vmatprep.subr.mxu0 0.0
      %540 = vmatpush1.msra.mxu0 %v457
      %541 = vmatprep.subr.mxu0 0.0
      %542 = vmatpush1.msra.mxu0 %v458
      %543 = vmatprep.subr.mxu0 0.0
      %544 = vmatpush1.msra.mxu0 %v459
      %545 = vmatprep.subr.mxu0 0.0
      %546 = vmatpush1.msra.mxu0 %v460
      %547 = vmatprep.subr.mxu0 0.0
      %548 = vmatpush1.msra.mxu0 %v461
      %549 = vmatprep.mubr.f32.mxu0 %v410
      %550 = vmatmul.mubr.f32.gmra.mrb[0].mxu0 %v420
      %v551 = vpop.f32.mrb[0].mxu0
      %v552 = vadd.f32 %v483, %v551
      %v553 = vpop.f32.mrb[0].mxu0
      %554 = vmatprep.mubr.f32.mxu0 %v411
      %555 = vmatmul.mubr.f32.gmra.mrb[0].mxu0 %v421
      %v556 = vpop.f32.mrb[0].mxu0
      %v557 = vadd.f32 %v483, %v556
      %v558 = vpop.f32.mrb[0].mxu0
      %559 = vdwg.mxu0
      %560 = vmatprep.subr.mxu0 0.0
      %561 = vmatpush1.msra.mxu0 %v462
      %562 = vmatprep.subr.mxu0 0.0
      %563 = vmatpush1.msra.mxu0 %v463
      %564 = vmatprep.subr.mxu0 0.0
      %565 = vmatpush1.msra.mxu0 %v464
      %566 = vmatprep.subr.mxu0 0.0
      %567 = vmatpush1.msra.mxu0 %v465
      %568 = vmatprep.subr.mxu0 0.0
      %569 = vmatpush1.msra.mxu0 %v466
      %570 = vmatprep.subr.mxu0 0.0
      %571 = vmatpush1.msra.mxu0 %v467
      %572 = vmatprep.subr.mxu0 0.0
      %573 = vmatpush1.msra.mxu0 %v468
      %574 = vmatprep.subr.mxu0 0.0
      %575 = vmatpush1.msra.mxu0 %v469
      %576 = vmatprep.subr.mxu0 0.0
      %577 = vmatpush1.msra.mxu0 %v470
      %578 = vmatprep.subr.mxu0 0.0
      %579 = vmatpush1.msra.mxu0 %v471
      %580 = vmatprep.subr.mxu0 0.0
      %581 = vmatpush1.msra.mxu0 %v472
      %582 = vmatprep.subr.mxu0 0.0
      %583 = vmatpush1.msra.mxu0 %v473
      %584 = vmatprep.subr.mxu0 0.0
      %585 = vmatpush1.msra.mxu0 %v474
      %586 = vmatprep.subr.mxu0 0.0
      %587 = vmatpush1.msra.mxu0 %v475
      %588 = vmatprep.subr.mxu0 0.0
      %589 = vmatpush1.msra.mxu0 %v476
      %590 = vmatprep.subr.mxu0 0.0
      %591 = vmatpush1.msra.mxu0 %v477
      %592 = vmatprep.subr.mxu0 0.0
      %593 = vmatpush1.msra.mxu0 0.0
      %594 = vmatprep.subr.mxu0 0.0
      %595 = vmatpush1.msra.mxu0 0.0
      %596 = vmatprep.subr.mxu0 0.0
      %597 = vmatpush1.msra.mxu0 0.0
      %598 = vmatprep.subr.mxu0 0.0
      %599 = vmatpush1.msra.mxu0 0.0
      %600 = vmatprep.subr.mxu0 0.0
      %601 = vmatpush1.msra.mxu0 0.0
      %602 = vmatprep.subr.mxu0 0.0
      %603 = vmatpush1.msra.mxu0 0.0
      %604 = vmatprep.subr.mxu0 0.0
      %605 = vmatpush1.msra.mxu0 0.0
      %606 = vmatprep.subr.mxu0 0.0
      %607 = vmatpush1.msra.mxu0 0.0
      %608 = vmatprep.subr.mxu0 0.0
      %609 = vmatpush1.msra.mxu0 0.0
      %610 = vmatprep.subr.mxu0 0.0
      %611 = vmatpush1.msra.mxu0 0.0
      %612 = vmatprep.subr.mxu0 0.0
      %613 = vmatpush1.msra.mxu0 0.0
      %614 = vmatprep.subr.mxu0 0.0
      %615 = vmatpush1.msra.mxu0 0.0
      %616 = vmatprep.subr.mxu0 0.0
      %617 = vmatpush1.msra.mxu0 0.0
      %618 = vmatprep.subr.mxu0 0.0
      %619 = vmatpush1.msra.mxu0 0.0
      %620 = vmatprep.subr.mxu0 0.0
      %621 = vmatpush1.msra.mxu0 0.0
      %622 = vmatprep.subr.mxu0 0.0
      %623 = vmatpush1.msra.mxu0 0.0
      %624 = vmatprep.mubr.f32.mxu0 0.0
      %625 = vmatmul.mubr.f32.gmra.mrb[0].mxu0 %v428
      %v626 = vpop.f32.mrb[0].mxu0
      %v627 = vadd.f32 %v552, %v626
      %v628 = vpop.f32.mrb[0].mxu0
      %629 = vmatprep.mubr.f32.mxu0 0.0
      %630 = vmatmul.mubr.f32.gmra.mrb[0].mxu0 %v429
      %v631 = vpop.f32.mrb[0].mxu0
      %v632 = vadd.f32 %v557, %v631
      %v633 = vpop.f32.mrb[0].mxu0
      %634 = vdwg.mxu0
      %v635 = vmax.f32 %v627, 0.0
      %v636 = vmax.f32 %v632, 0.0
      %637 = vst [vmem:[%s226] sm:$0xff] %v635
      %638 = vst [vmem:[%s226 + $0x8] sm:$0xff] %v636
      %s639 = smul.u32 2, %s16
      %p640 = scmp.lt.s32.totalorder %s639, 3
      %s641 = scalar_select %p640, %s639, 3
      %s642 = smul.addr %s641, 8
      %s643 = scalar_lea.vmem %s5, %s642
      // Predicated region
      $region41: #{double_conv.1} parent=39 // pred_check
        %p644 = pneg %p144
      $region42: #{double_conv.1} parent=39 // pred_check_branch
        %646 = sbr.rel (%p644) target = $region44
      $region43: #{double_conv.1} parent=39 // pred_region
        %s647 = smul.u32 2, %s16
      $region44: #{double_conv.1} parent=39 // pred_fallthru
        _
    $region40: #{double_conv.1} parent=5 // pred_fallthru
      _
    %p648 = scmp.le.s32.totalorder 2, %s11
    // Predicated region
    $region45: #{double_conv.1} parent=5 // pred_check
      %p649 = pneg %p648
    $region46: #{double_conv.1} parent=5 // pred_check_branch
      %651 = sbr.rel (%p649) target = $region48
    $region47: #{double_conv.1} parent=5 // pred_region
      %s652 = ssub.s32 %s11, 2
      // Predicated region
      $region49: #{double_conv.1} parent=47 // pred_check
        %p653 = pneg %p150
      $region50: #{double_conv.1} parent=47 // pred_check_branch
        %655 = sbr.rel (%p653) target = $region52
      $region51: #{double_conv.1} parent=47 // pred_region
        %s656 = smul.u32 2, %s17
        %p657 = scmp.lt.s32.totalorder %s656, 3
        %s658 = scalar_select %p657, %s656, 3
        %s659 = smul.addr %s658, 8
        %s660 = scalar_lea.vmem %s5, %s659
      $region52: #{double_conv.1} parent=47 // pred_fallthru
        _
    $region48: #{double_conv.1} parent=5 // pred_fallthru
      _
  $region6: #{double_conv.1} parent=0 // loop_footer
    %s15 = sadd.s32 1, %s11
  $region7: #{double_conv.1} parent=0 // loop_footer_branch
    %10 = sbr.rel target = $region3
  $region8: #{double_conv.1} parent=0 // loop_exit
    _

</llo_original>
